<compile_context>
chip_gen: v6e
topology: v6e:2x2x1
jax: 0.10.0
libtpu: 0.0.40
codegen_flags: <defaults>
</compile_context>

<pallas_src>
import functools

import jax
import jax.numpy as jnp
from jax import lax
from jax.experimental import pallas as pl
from jax.experimental.pallas import tpu as pltpu


def _round_up(x, m):
    return (x + m - 1) // m * m


_TM_MAX = 512                      # M-tile cap
_TN_MAX = 512                      # N-tile cap (every ResNet-18 layer has Cout <= 512)
_VMEM_CAP = 48 * 1024 * 1024       # scoped-VMEM ceiling (v7x physical VMEM is 64 MiB)


def _choose_m_tiling(M, cap=_TM_MAX):
    """Return (tm, Mp): tm divides Mp; Mp == M unless no multiple-of-8 divisor of M
    that is <= cap exists (rare fallback pad).  M <= cap -> single full-extent tile."""
    if M <= cap:
        return M, M
    t = cap - cap % 8
    while t >= 8:
        if M % t == 0:
            return t, M
        t -= 8
    return cap, _round_up(M, cap)


def _choose_n_tile(N, cap=_TN_MAX):
    if N <= cap:
        return N
    t = cap - cap % 128
    while t >= 128:
        if N % t == 0:
            return t
        t -= 128
    return N


# --------------------------------------------------------------------------
# Pallas kernels
# --------------------------------------------------------------------------

def _matmul_affine_kernel(*refs, apply_relu, has_residual):
    """o = relu?( (a @ b) * scale + shift [+ residual] ) for one (tm, tn) tile.

    K is NOT tiled (single K step): bf16 A/B tiles are fully VMEM-resident, the
    MXU accumulates in f32, and the BN/residual/ReLU epilogue is applied right
    away -- no scratch accumulator or pl.when init/finalize needed."""
    if has_residual:
        a_ref, b_ref, scale_ref, shift_ref, res_ref, o_ref = refs
    else:
        a_ref, b_ref, scale_ref, shift_ref, o_ref = refs
        res_ref = None

    acc = jnp.dot(a_ref[...], b_ref[...], preferred_element_type=jnp.float32)
    out = acc * scale_ref[...] + shift_ref[...]
    if res_ref is not None:
        out = out + res_ref[...].astype(jnp.float32)
    if apply_relu:
        out = jnp.maximum(out, 0.0)
    o_ref[...] = out.astype(o_ref.dtype)


def pallas_matmul_affine(a, packed, residual=None, relu=False,
                         out_dtype=jnp.bfloat16):
    """bf16 matmul (f32 accumulation) with fused per-column affine epilogue,
    optional residual add and optional ReLU.  Weights arrive pre-packed
    (transposed, bf16, exact extents) from init time; the common path performs
    no padding copies of A / residual at all."""
    b_w, scale, shift = packed['w'], packed['scale'], packed['shift']
    K, N = b_w.shape
    M, Ka = a.shape
    assert Ka == K, (Ka, K)

    tm, Mp = _choose_m_tiling(M)
    tn = _choose_n_tile(N)

    # v7x has two TensorCores: expose >= 2 blocks along a 'parallel' grid axis
    # whenever the problem allows it (a (1,1) grid would idle one TC there;
    # harmless on single-TC v5e / v6e).
    if Mp // tm == 1:
        if tn == N and N >= 256 and N % 256 == 0:
            tn = N // 2
        elif tm >= 16 and tm % 16 == 0:
            tm //= 2

    has_res = residual is not None
    if Mp != M:                           # rare fallback only
        a = jnp.pad(a, ((0, Mp - M), (0, 0)))
        if has_res:
            residual = jnp.pad(residual, ((0, Mp - M), (0, 0)))

    a = a.astype(jnp.bfloat16)
    grid = (Mp // tm, N // tn)

    in_specs = [
        pl.BlockSpec((tm, K), lambda i, j: (i, 0)),   # A (patch matrix) - read once
        pl.BlockSpec((K, tn), lambda i, j: (0, j)),   # B (pre-packed bf16 weights)
        pl.BlockSpec((1, tn), lambda i, j: (0, j)),   # BN scale
        pl.BlockSpec((1, tn), lambda i, j: (0, j)),   # BN shift
    ]
    args = [a, b_w, scale, shift]
    if has_res:
        in_specs.append(pl.BlockSpec((tm, tn), lambda i, j: (i, j)))
        args.append(residual.astype(jnp.bfloat16))

    out_isz = jnp.dtype(out_dtype).itemsize
    # Double-buffered A/B/out(/residual) tiles; explicit scoped-VMEM request so
    # big tiles compile on every generation (v5e default 16 MiB, v6e/v7x 32 MiB)
    # while staying well inside v7x's 64 MiB physical VMEM.
    vmem_bytes = 2 * (tm * K * 2 + K * tn * 2 + tm * tn * out_isz
                      + (tm * tn * 2 if has_res else 0)) + 8 * tn * 4 + (2 << 20)
    vmem_limit = int(min(max(vmem_bytes, 32 << 20), _VMEM_CAP))

    kernel = functools.partial(_matmul_affine_kernel,
                               apply_relu=relu, has_residual=has_res)
    out = pl.pallas_call(
        kernel,
        out_shape=jax.ShapeDtypeStruct((Mp, N), out_dtype),
        grid=grid,
        in_specs=in_specs,
        out_specs=pl.BlockSpec((tm, tn), lambda i, j: (i, j)),
        compiler_params=pltpu.CompilerParams(
            dimension_semantics=("parallel", "parallel"),
            vmem_limit_bytes=vmem_limit),
        cost_estimate=pl.CostEstimate(
            flops=2 * Mp * K * N, transcendentals=0,
            bytes_accessed=Mp * K * 2 + K * N * 2 + Mp * N * out_isz
                           + (Mp * N * 2 if has_res else 0)),
    )(*args)
    return out[:M] if Mp != M else out


def _mean_reduce_kernel(x_ref, o_ref):
    o_ref[...] = jnp.mean(x_ref[...].astype(jnp.float32), axis=1)


def pallas_global_avgpool(x_nhwc):
    """AdaptiveAvgPool2d((1,1)) + flatten: mean over spatial -> (N, C) f32,
    tiled over channel blocks.  No padding copies needed."""
    N, H, W, C = x_nhwc.shape
    HW = H * W
    x = x_nhwc.reshape(N, HW, C)
    tc = _choose_n_tile(C)
    grid = (C // tc,)
    return pl.pallas_call(
        _mean_reduce_kernel,
        out_shape=jax.ShapeDtypeStruct((N, C), jnp.float32),
        grid=grid,
        in_specs=[pl.BlockSpec((N, HW, tc), lambda c: (0, 0, c))],
        out_specs=pl.BlockSpec((N, tc), lambda c: (0, c)),
        compiler_params=pltpu.CompilerParams(dimension_semantics=("parallel",)),
    )(x)


# --------------------------------------------------------------------------
# MaxPool: single fused windowed-max pass (one read of the stem activation)
# --------------------------------------------------------------------------

def maxpool2d(x_nhwc, ksize=3, stride=2, pad=1):
    # TODO(synk): a dedicated Pallas windowed-max kernel could additionally fuse
    # this with the stem conv epilogue / the following im2col.
    neg_inf = jnp.asarray(-jnp.inf, dtype=x_nhwc.dtype)
    return lax.reduce_window(
        x_nhwc, neg_inf, lax.max,
        window_dimensions=(1, ksize, ksize, 1),
        window_strides=(1, stride, stride, 1),
        padding=((0, 0), (pad, pad), (pad, pad), (0, 0)))


# --------------------------------------------------------------------------
# Conv = im2col (glue) + tiled Pallas matmul kernel
# --------------------------------------------------------------------------

def _im2col(x_nhwc, kh, kw, stride, pad):
    """Patch-matrix construction (plain-JAX glue), emitted directly in the exact
    (M, K) bf16 layout the matmul kernel consumes (no later pad copy).
    TODO(synk): fuse this gather into the matmul kernel (halo'd input blocks or
    manual make_async_copy) to cut 3x3-conv activation HBM traffic ~9x."""
    N, H, W, C = x_nhwc.shape
    Ho = (H + 2 * pad - kh) // stride + 1
    Wo = (W + 2 * pad - kw) // stride + 1
    xp = x_nhwc if pad == 0 else jnp.pad(
        x_nhwc, ((0, 0), (pad, pad), (pad, pad), (0, 0)))
    if kh == 1 and kw == 1:   # 1x1 conv: pure (strided) subsample, no inflation
        s = lax.slice(xp, (0, 0, 0, 0),
                      (N, stride * (Ho - 1) + 1, stride * (Wo - 1) + 1, C),
                      (1, stride, stride, 1))
        return s.reshape(N * Ho * Wo, C), (N, Ho, Wo)
    cols = []
    for i in range(kh):
        for j in range(kw):
            s = lax.slice(xp, (0, i, j, 0),
                          (N, i + stride * (Ho - 1) + 1,
                           j + stride * (Wo - 1) + 1, C),
                          (1, stride, stride, 1))
            cols.append(s)                                  # (N, Ho, Wo, C)
    pat = jnp.concatenate(cols, axis=-1)                    # tap-major, channel-minor
    return pat.reshape(N * Ho * Wo, kh * kw * C), (N, Ho, Wo)


def conv_bn_act(x_nhwc, packed, stride, pad, relu, residual_nhwc=None):
    """conv2d (no bias) -> eval-BN affine -> (+ residual) -> (ReLU), bf16 out."""
    kh, kw = packed['kh'], packed['kw']
    patches, (N, Ho, Wo) = _im2col(x_nhwc, kh, kw, stride, pad)
    res = None
    if residual_nhwc is not None:
        # NOTE: the identity path is bf16 (activation dtype); the add happens in f32
        # inside the kernel epilogue (small deviation vs torchvision's f32 identity).
        res = residual_nhwc.reshape(N * Ho * Wo, packed['N'])
    out = pallas_matmul_affine(patches, packed, residual=res, relu=relu)
    return out.reshape(N, Ho, Wo, packed['N'])


# --------------------------------------------------------------------------
# Deterministic parameter initialization + weight packing (ResNet-18 shapes)
# --------------------------------------------------------------------------

_BN_EPS = 1e-5


def _pack_conv(w, scale, shift):
    """Pre-transpose/cast the weight once at init: (Cout,Cin,kh,kw) -> bf16
    (K, Cout) in im2col K-order (tap-major, channel-minor).  Exact extents:
    the matmul path never needs per-call pad copies."""
    Cout, Cin, kh, kw = w.shape
    w_mat = jnp.transpose(w, (2, 3, 1, 0)).reshape(kh * kw * Cin, Cout)
    return {'w': w_mat.astype(jnp.bfloat16),
            'scale': scale.reshape(1, Cout).astype(jnp.float32),
            'shift': shift.reshape(1, Cout).astype(jnp.float32),
            'K': kh * kw * Cin, 'N': Cout, 'kh': kh, 'kw': kw}


def _init_convbn(key, cout, cin, k):
    k1, k2, k3 = jax.random.split(key, 3)
    fan_in = cin * k * k
    w = jax.random.normal(k1, (cout, cin, k, k), jnp.float32) * jnp.sqrt(2.0 / fan_in)
    gamma = jax.random.uniform(k2, (cout,), jnp.float32, 0.8, 1.2)
    beta = jax.random.normal(k3, (cout,), jnp.float32) * 0.05
    run_mean = jnp.zeros((cout,), jnp.float32)
    run_var = jnp.ones((cout,), jnp.float32)
    scale = gamma / jnp.sqrt(run_var + _BN_EPS)             # fold eval-mode BN
    shift = beta - run_mean * scale
    return _pack_conv(w, scale, shift)


def init_resnet18(key, in_ch, num_classes):
    keys = iter(jax.random.split(key, 64))
    params = {}
    params['stem'] = _init_convbn(next(keys), 64, in_ch, 7)

    layers = []
    cin = 64
    for cout, stride, nblocks in [(64, 1, 2), (128, 2, 2), (256, 2, 2), (512, 2, 2)]:
        blocks = []
        for b in range(nblocks):
            s = stride if b == 0 else 1
            blk = {'stride': s,
                   'c1': _init_convbn(next(keys), cout, cin, 3),
                   'c2': _init_convbn(next(keys), cout, cout, 3)}
            if s != 1 or cin != cout:
                blk['down'] = _init_convbn(next(keys), cout, cin, 1)
            blocks.append(blk)
            cin = cout
        layers.append(blocks)
    params['layers'] = layers

    kfc1, kfc2 = jax.random.split(next(keys))
    fc_w = jax.random.normal(kfc1, (num_classes, 512), jnp.float32) * 0.05
    fc_b = jax.random.normal(kfc2, (num_classes,), jnp.float32) * 0.01
    # Pack fc as a 1x1 "conv": scale = 1, shift = bias.
    params['fc'] = _pack_conv(fc_w.reshape(num_classes, 512, 1, 1),
                              jnp.ones((num_classes,), jnp.float32), fc_b)
    return params


# --------------------------------------------------------------------------
# Forward pass (matches torchvision resnet18 with replaced conv1 / fc, eval mode)
# --------------------------------------------------------------------------

def resnet18_forward(params, x_nchw):
    x = jnp.transpose(x_nchw, (0, 2, 3, 1)).astype(jnp.bfloat16)   # NCHW -> NHWC

    x = conv_bn_act(x, params['stem'], stride=2, pad=3, relu=True)  # conv1+bn1+relu
    x = maxpool2d(x, ksize=3, stride=2, pad=1)                      # maxpool

    for blocks in params['layers']:                                 # layer1..layer4
        for blk in blocks:
            identity = x
            out = conv_bn_act(x, blk['c1'], stride=blk['stride'], pad=1, relu=True)
            if 'down' in blk:
                identity = conv_bn_act(x, blk['down'], stride=blk['stride'],
                                       pad=0, relu=False)
            # conv2 -> bn2 -> (+identity) -> relu, fused in one kernel epilogue
            x = conv_bn_act(out, blk['c2'], stride=1, pad=1, relu=True,
                            residual_nhwc=identity)

    feat = pallas_global_avgpool(x)                                 # (N, 512) f32
    logits = pallas_matmul_affine(feat.astype(jnp.bfloat16), params['fc'],
                                  relu=False, out_dtype=jnp.float32)  # fc
    return logits


# --------------------------------------------------------------------------

if __name__ == "__main__":
    key = jax.random.PRNGKey(0)
    kp, kx = jax.random.split(key)

    n_input_channels, num_classes = 4, 10
    params = init_resnet18(kp, in_ch=n_input_channels, num_classes=num_classes)

    # PyTorch-style NCHW input
    x = jax.random.normal(kx, (2, n_input_channels, 16, 16), jnp.float32)

    logits = resnet18_forward(params, x)
    jax.block_until_ready(logits)

    assert logits.shape == (2, num_classes), logits.shape
    assert bool(jnp.all(jnp.isfinite(logits)))
    print("KERNEL_OK")
</pallas_src>

<mosaic_0001>
module attributes {stable_mosaic.version = 11 : i64} {
  func.func @_matmul_affine_kernel(%arg0: i32, %arg1: i32, %arg2: memref<64x196xbf16, #tpu.memory_space<vmem>>, %arg3: memref<196x64xbf16, #tpu.memory_space<vmem>>, %arg4: memref<1x64xf32, #tpu.memory_space<vmem>>, %arg5: memref<1x64xf32, #tpu.memory_space<vmem>>, %arg6: memref<64x64xbf16, #tpu.memory_space<vmem>>) attributes {dimension_semantics = [#tpu.dimension_semantics<parallel>, #tpu.dimension_semantics<parallel>], iteration_bounds = array<i64: 2, 1>, scalar_prefetch = 0 : i64, scratch_operands = 0 : i64, tpu.core_type = #tpu.core_type<tc>, window_params = [{transform_indices = @transform_0, window_bounds = array<i64: 64, 196>}, {transform_indices = @transform_1, window_bounds = array<i64: 196, 64>}, {transform_indices = @transform_2, window_bounds = array<i64: 1, 64>}, {transform_indices = @transform_3, window_bounds = array<i64: 1, 64>}, {transform_indices = @transform_4, window_bounds = array<i64: 64, 64>}]} {
    %c0 = arith.constant 0 : index
    %c0_0 = arith.constant 0 : index
    %0 = vector.load %arg2[%c0, %c0_0] : memref<64x196xbf16, #tpu.memory_space<vmem>>, vector<64x196xbf16>
    %c0_1 = arith.constant 0 : index
    %c0_2 = arith.constant 0 : index
    %1 = vector.load %arg3[%c0_1, %c0_2] : memref<196x64xbf16, #tpu.memory_space<vmem>>, vector<196x64xbf16>
    %cst = arith.constant dense<0.000000e+00> : vector<64x64xf32>
    %2 = tpu.matmul %0, %1, %cst {dimension_numbers = #tpu.dot_dimension_numbers<[1], [0], [0], [1], [0, 0, 1, 1], [], []>} : vector<64x196xbf16>, vector<196x64xbf16>, vector<64x64xf32> -> vector<64x64xf32>
    %c0_3 = arith.constant 0 : index
    %c0_4 = arith.constant 0 : index
    %3 = vector.load %arg4[%c0_3, %c0_4] : memref<1x64xf32, #tpu.memory_space<vmem>>, vector<1x64xf32>
    %4 = vector.broadcast %3 : vector<1x64xf32> to vector<64x64xf32>
    %5 = arith.mulf %2, %4 : vector<64x64xf32>
    %c0_5 = arith.constant 0 : index
    %c0_6 = arith.constant 0 : index
    %6 = vector.load %arg5[%c0_5, %c0_6] : memref<1x64xf32, #tpu.memory_space<vmem>>, vector<1x64xf32>
    %7 = vector.broadcast %6 : vector<1x64xf32> to vector<64x64xf32>
    %8 = arith.addf %5, %7 : vector<64x64xf32>
    %cst_7 = arith.constant 0.000000e+00 : f32
    %9 = vector.broadcast %cst_7 : f32 to vector<64x64xf32>
    %10 = arith.maximumf %8, %9 : vector<64x64xf32>
    %11 = arith.truncf %10 : vector<64x64xf32> to vector<64x64xbf16>
    %c0_8 = arith.constant 0 : index
    %c0_9 = arith.constant 0 : index
    %12 = vector.load %arg6[%c0_8, %c0_9] : memref<64x64xbf16, #tpu.memory_space<vmem>>, vector<64x64xbf16>
    tpu.vector_store %arg6[%c0_8, %c0_9], %11 {strides = array<i32>} : memref<64x64xbf16, #tpu.memory_space<vmem>>, vector<64x64xbf16>,
    return
  }
  func.func @transform_0(%arg0: i32, %arg1: i32) -> (i32, i32) {
    %c0_i32 = arith.constant 0 : i32
    %c0_i32_0 = arith.constant 0 : i32
    return %arg0, %c0_i32 : i32, i32
  }
  func.func @transform_1(%arg0: i32, %arg1: i32) -> (i32, i32) {
    %c0_i32 = arith.constant 0 : i32
    %c0_i32_0 = arith.constant 0 : i32
    return %c0_i32, %arg1 : i32, i32
  }
  func.func @transform_2(%arg0: i32, %arg1: i32) -> (i32, i32) {
    %c0_i32 = arith.constant 0 : i32
    %c0_i32_0 = arith.constant 0 : i32
    return %c0_i32, %arg1 : i32, i32
  }
  func.func @transform_3(%arg0: i32, %arg1: i32) -> (i32, i32) {
    %c0_i32 = arith.constant 0 : i32
    %c0_i32_0 = arith.constant 0 : i32
    return %c0_i32, %arg1 : i32, i32
  }
  func.func @transform_4(%arg0: i32, %arg1: i32) -> (i32, i32) {
    %c0_i32 = arith.constant 0 : i32
    return %arg0, %arg1 : i32, i32
  }
}

</mosaic_0001>

<llo_original>
// kernel: tpu_custom_call.1
$region0: #{tpu_custom_call.1}
  #allocation0 [shape = 'u32[]', space=smem, size = 0x4, offset = 0x4, fixed_abs, tag = 'smem constant byte address 0x4 - core index']
  #allocation1 [shape = 'u32[144,128]{1,0:T(1,128)}', space=vmem, size = 0x12000, scoped, tag = 'internal scratch']
  %s0 = inlined_call_operand.vmem [shape: bf16[128,196], index: 0, kind: input, shape index: {}]
  %s1 = inlined_call_operand.vmem [shape: bf16[196,64], index: 1, kind: input, shape index: {}]
  %s2 = inlined_call_operand.vmem [shape: f32[1,64], index: 2, kind: input, shape index: {}]
  %s3 = inlined_call_operand.vmem [shape: f32[1,64], index: 3, kind: input, shape index: {}]
  %s4 = inlined_call_operand.vmem [shape: bf16[128,64], index: 4, kind: output, shape index: {}]
  %s5 = sld [smem:[#allocation0]]
  $region49: #{tpu_custom_call.1} parent=0
    _
  %s7 = ssub.s32 1, %s5
  %s8 = scalar_select 0, %s7, %s5
  loop: start=0, step=1, limit=4
  $region2: #{tpu_custom_call.1} parent=0 // loop_pre_header
    _
  $region3: #{tpu_custom_call.1} parent=0 // loop_header
    %s10 = sphi 0, %s14
    %p11 = scmp.ge.s32.totalorder %s10, 4
    %s17 = sphi 0, %s29
    %s18 = sphi 0, %s25
    %s19 = sphi 0, %s17
    %s20 = sphi 0, %s18
    %s21 = sphi 0, %s19
    %s22 = sphi 0, %s20
    %s32 = sphi 0, %s34
    %s35 = sphi 0, %s32
    %s36 = sphi 0, %s35
    %s52 = sphi 0, %s36
    %s58 = sphi 0, %s60
    %s61 = sphi 0, %s58
    %s62 = sphi 0, %s61
    %s78 = sphi 0, %s62
    %s84 = sphi 0, %s86
    %s87 = sphi 0, %s84
    %s88 = sphi 0, %s87
    %s104 = sphi 0, %s88
    %s110 = sphi 0, %s112
    %s113 = sphi 0, %s110
    %s114 = sphi 0, %s113
    %s130 = sphi 0, %s114
    %s138 = sphi 0, %s140
    %s141 = sphi 0, %s138
    %s142 = sphi 0, %s141
    %s158 = sphi 0, %s142
  $region4: #{tpu_custom_call.1} parent=0 // loop_header_branch
    %13 = sbr.rel (%p11) target = $region8
  $region5: #{tpu_custom_call.1} parent=0 // loop_body
    %s15 = ssub.s32 %s10, 1
    %s16 = ssub.s32 %s10, 2
    %s23 = sadd.s32 1, %s18
    %p24 = scmp.ge.s32.totalorder %s23, 1
    %s25 = scalar_select %p24, 0, %s23
    %s26 = sadd.s32 1, %s17
    %s27 = scalar_select %p24, %s26, %s17
    %p28 = scmp.ge.s32.totalorder %s27, 2
    %s29 = scalar_select %p28, 0, %s27
    %s30 = ssub.s32 %s17, %s29
    %p31 = scmp.eq.s32.totalorder %s30, 0
    %s33 = sadd.s32 %s32, 1
    %s34 = scalar_select %p31, %s32, %s33
    %p37 = pneg %p31
    %p38 = scmp.eq.s32.totalorder %s10, 1
    %p39 = por %p37, %p38
    %p40 = scmp.ne.s32.totalorder %s32, %s35
    %p41 = scmp.eq.s32.totalorder %s10, 0
    %p42 = por %p40, %p41
    %p43 = scmp.ne.s32.totalorder %s32, %s35
    %p44 = scmp.eq.s32.totalorder %s15, 1
    %p45 = por %p43, %p44
    %p46 = scmp.ne.s32.totalorder %s35, %s36
    %p47 = scmp.eq.s32.totalorder %s15, 0
    %p48 = por %p46, %p47
    %p49 = scmp.ne.s32.totalorder %s35, %s36
    %p50 = scmp.eq.s32.totalorder %s16, 1
    %p51 = por %p49, %p50
    %p53 = scmp.ne.s32.totalorder %s36, %s52
    %p54 = scmp.eq.s32.totalorder %s16, 0
    %p55 = por %p53, %p54
    %s56 = ssub.s32 %s18, %s25
    %p57 = scmp.eq.s32.totalorder %s56, 0
    %s59 = sadd.s32 %s58, 1
    %s60 = scalar_select %p57, %s58, %s59
    %p63 = pneg %p57
    %p64 = scmp.eq.s32.totalorder %s10, 1
    %p65 = por %p63, %p64
    %p66 = scmp.ne.s32.totalorder %s58, %s61
    %p67 = scmp.eq.s32.totalorder %s10, 0
    %p68 = por %p66, %p67
    %p69 = scmp.ne.s32.totalorder %s58, %s61
    %p70 = scmp.eq.s32.totalorder %s15, 1
    %p71 = por %p69, %p70
    %p72 = scmp.ne.s32.totalorder %s61, %s62
    %p73 = scmp.eq.s32.totalorder %s15, 0
    %p74 = por %p72, %p73
    %p75 = scmp.ne.s32.totalorder %s61, %s62
    %p76 = scmp.eq.s32.totalorder %s16, 1
    %p77 = por %p75, %p76
    %p79 = scmp.ne.s32.totalorder %s62, %s78
    %p80 = scmp.eq.s32.totalorder %s16, 0
    %p81 = por %p79, %p80
    %s82 = ssub.s32 %s18, %s25
    %p83 = scmp.eq.s32.totalorder %s82, 0
    %s85 = sadd.s32 %s84, 1
    %s86 = scalar_select %p83, %s84, %s85
    %p89 = pneg %p83
    %p90 = scmp.eq.s32.totalorder %s10, 1
    %p91 = por %p89, %p90
    %p92 = scmp.ne.s32.totalorder %s84, %s87
    %p93 = scmp.eq.s32.totalorder %s10, 0
    %p94 = por %p92, %p93
    %p95 = scmp.ne.s32.totalorder %s84, %s87
    %p96 = scmp.eq.s32.totalorder %s15, 1
    %p97 = por %p95, %p96
    %p98 = scmp.ne.s32.totalorder %s87, %s88
    %p99 = scmp.eq.s32.totalorder %s15, 0
    %p100 = por %p98, %p99
    %p101 = scmp.ne.s32.totalorder %s87, %s88
    %p102 = scmp.eq.s32.totalorder %s16, 1
    %p103 = por %p101, %p102
    %p105 = scmp.ne.s32.totalorder %s88, %s104
    %p106 = scmp.eq.s32.totalorder %s16, 0
    %p107 = por %p105, %p106
    %s108 = ssub.s32 %s18, %s25
    %p109 = scmp.eq.s32.totalorder %s108, 0
    %s111 = sadd.s32 %s110, 1
    %s112 = scalar_select %p109, %s110, %s111
    %p115 = pneg %p109
    %p116 = scmp.eq.s32.totalorder %s10, 1
    %p117 = por %p115, %p116
    %p118 = scmp.ne.s32.totalorder %s110, %s113
    %p119 = scmp.eq.s32.totalorder %s10, 0
    %p120 = por %p118, %p119
    %p121 = scmp.ne.s32.totalorder %s110, %s113
    %p122 = scmp.eq.s32.totalorder %s15, 1
    %p123 = por %p121, %p122
    %p124 = scmp.ne.s32.totalorder %s113, %s114
    %p125 = scmp.eq.s32.totalorder %s15, 0
    %p126 = por %p124, %p125
    %p127 = scmp.ne.s32.totalorder %s113, %s114
    %p128 = scmp.eq.s32.totalorder %s16, 1
    %p129 = por %p127, %p128
    %p131 = scmp.ne.s32.totalorder %s114, %s130
    %p132 = scmp.eq.s32.totalorder %s16, 0
    %p133 = por %p131, %p132
    %s134 = ssub.s32 %s17, %s29
    %s135 = ssub.s32 %s18, %s25
    %s136 = sor.u32 %s134, %s135
    %p137 = scmp.eq.s32.totalorder %s136, 0
    %s139 = sadd.s32 %s138, 1
    %s140 = scalar_select %p137, %s138, %s139
    %p143 = pneg %p137
    %p144 = scmp.eq.s32.totalorder %s10, 1
    %p145 = por %p143, %p144
    %p146 = scmp.ne.s32.totalorder %s138, %s141
    %p147 = scmp.eq.s32.totalorder %s10, 0
    %p148 = por %p146, %p147
    %p149 = scmp.ne.s32.totalorder %s138, %s141
    %p150 = scmp.eq.s32.totalorder %s15, 1
    %p151 = por %p149, %p150
    %p152 = scmp.ne.s32.totalorder %s141, %s142
    %p153 = scmp.eq.s32.totalorder %s15, 0
    %p154 = por %p152, %p153
    %p155 = scmp.ne.s32.totalorder %s141, %s142
    %p156 = scmp.eq.s32.totalorder %s16, 1
    %p157 = por %p155, %p156
    %p159 = scmp.ne.s32.totalorder %s142, %s158
    %p160 = scmp.eq.s32.totalorder %s16, 0
    %p161 = por %p159, %p160
    %p162 = scmp.le.s32.totalorder 1, %s10
    %p163 = scmp.lt.s32.totalorder %s10, 3
    %p164 = pnand %p162, %p163
    %p165 = pneg %p164
    // Predicated region
    $region9: #{tpu_custom_call.1} parent=5 // pred_check
      _
    $region10: #{tpu_custom_call.1} parent=5 // pred_check_branch
      %167 = sbr.rel (%p164) target = $region12
    $region11: #{tpu_custom_call.1} parent=5 // pred_region
      %s168 = ssub.s32 %s10, 1
      // Predicated region
      $region13: #{tpu_custom_call.1} parent=11 // pred_check
        %p169 = pneg %p74
      $region14: #{tpu_custom_call.1} parent=11 // pred_check_branch
        %171 = sbr.rel (%p169) target = $region16
      $region15: #{tpu_custom_call.1} parent=11 // pred_region
        %p172 = scmp.lt.s32.totalorder %s20, 0
        %s173 = scalar_select %p172, %s20, 0
        %s174 = smul.addr %s173, 4
        %s175 = scalar_lea.vmem %s1, %s174
      $region16: #{tpu_custom_call.1} parent=11 // pred_fallthru
        _
      // Predicated region
      $region17: #{tpu_custom_call.1} parent=11 // pred_check
        %p176 = pneg %p100
      $region18: #{tpu_custom_call.1} parent=11 // pred_check_branch
        %178 = sbr.rel (%p176) target = $region20
      $region19: #{tpu_custom_call.1} parent=11 // pred_region
        %p179 = scmp.lt.s32.totalorder %s20, 0
        %s180 = scalar_select %p179, %s20, 0
        %s181 = scalar_lea.vmem %s2, %s180
      $region20: #{tpu_custom_call.1} parent=11 // pred_fallthru
        _
      // Predicated region
      $region21: #{tpu_custom_call.1} parent=11 // pred_check
        %p182 = pneg %p126
      $region22: #{tpu_custom_call.1} parent=11 // pred_check_branch
        %184 = sbr.rel (%p182) target = $region24
      $region23: #{tpu_custom_call.1} parent=11 // pred_region
        %p185 = scmp.lt.s32.totalorder %s20, 0
        %s186 = scalar_select %p185, %s20, 0
        %s187 = scalar_lea.vmem %s3, %s186
      $region24: #{tpu_custom_call.1} parent=11 // pred_fallthru
        _
    $region12: #{tpu_custom_call.1} parent=5 // pred_fallthru
      _
    %p188 = scmp.lt.s32.totalorder %s10, 2
    // Predicated region
    $region25: #{tpu_custom_call.1} parent=5 // pred_check
      %p189 = pneg %p188
    $region26: #{tpu_custom_call.1} parent=5 // pred_check_branch
      %191 = sbr.rel (%p189) target = $region28
    $region27: #{tpu_custom_call.1} parent=5 // pred_region
      // Predicated region
      $region29: #{tpu_custom_call.1} parent=27 // pred_check
        %p192 = pneg %p42
      $region30: #{tpu_custom_call.1} parent=27 // pred_check_branch
        %194 = sbr.rel (%p192) target = $region32
      $region31: #{tpu_custom_call.1} parent=27 // pred_region
        %s195 = smul.u32 8, %s17
        %p196 = scmp.lt.s32.totalorder %s195, 15
        %s197 = scalar_select %p196, %s195, 15
        %s198 = smul.addr %s197, 2
        %s199 = smul.addr %s198, 4
        %s200 = scalar_lea.vmem %s0, %s199
        %s201 = smul.u32 8, %s17
      $region32: #{tpu_custom_call.1} parent=27 // pred_fallthru
        _
    $region28: #{tpu_custom_call.1} parent=5 // pred_fallthru
      _
    %p202 = scmp.le.s32.totalorder 1, %s10
    %p203 = scmp.lt.s32.totalorder %s10, 3
    %p204 = pnand %p202, %p203
    %p205 = pneg %p204
    // Predicated region
    $region33: #{tpu_custom_call.1} parent=5 // pred_check
      _
    $region34: #{tpu_custom_call.1} parent=5 // pred_check_branch
      %207 = sbr.rel (%p204) target = $region36
    $region35: #{tpu_custom_call.1} parent=5 // pred_region
      %s208 = ssub.s32 %s10, 1
      %s209 = smul.u32 8, %s19
      %p210 = scmp.lt.s32.totalorder %s209, 15
      %s211 = scalar_select %p210, %s209, 15
      %s212 = smul.addr %s211, 2
      %s213 = smul.addr %s212, 4
      %s214 = scalar_lea.vmem %s0, %s213
      %p215 = pneg %p48
      %p216 = pneg %p45
      %p217 = scmp.lt.s32.totalorder %s20, 0
      %s218 = scalar_select %p217, %s20, 0
      %s219 = smul.addr %s218, 4
      %s220 = scalar_lea.vmem %s1, %s219
      %p221 = pneg %p74
      %p222 = pneg %p71
      %p223 = scmp.lt.s32.totalorder %s20, 0
      %s224 = scalar_select %p223, %s20, 0
      %s225 = scalar_lea.vmem %s2, %s224
      %p226 = pneg %p100
      %p227 = pneg %p97
      %p228 = scmp.lt.s32.totalorder %s20, 0
      %s229 = scalar_select %p228, %s20, 0
      %s230 = scalar_lea.vmem %s3, %s229
      %p231 = pneg %p126
      %p232 = pneg %p123
      %p233 = pneg %p154
      %p234 = pneg %p151
      %s235 = smul.u32 8, %s19
      %p236 = scmp.lt.s32.totalorder %s235, 15
      %s237 = scalar_select %p236, %s235, 15
      %p238 = scmp.lt.s32.totalorder %s20, 0
      %s239 = scalar_select %p238, %s20, 0
      %s240 = sadd.s32 %s239, %s237
      %s241 = smul.addr %s240, 4
      %s242 = scalar_lea.vmem %s4, %s241
      %s243 = smul.u32 8, %s19
      %p244 = scmp.lt.s32.totalorder %s243, 15
      %s245 = scalar_select %p244, %s243, 15
      %s246 = smul.addr %s245, 2
      %s247 = smul.addr %s246, 4
      %s248 = scalar_lea.vmem %s0, %s247
      %s249 = smul.u32 8, %s19
      %p250 = scmp.lt.s32.totalorder %s20, 0
      %s251 = scalar_select %p250, %s20, 0
      %s252 = smul.addr %s251, 4
      %s253 = scalar_lea.vmem %s1, %s252
      %p254 = scmp.lt.s32.totalorder %s20, 0
      %s255 = scalar_select %p254, %s20, 0
      %s256 = scalar_lea.vmem %s2, %s255
      %p257 = scmp.lt.s32.totalorder %s20, 0
      %s258 = scalar_select %p257, %s20, 0
      %s259 = scalar_lea.vmem %s3, %s258
      %s260 = smul.u32 8, %s19
      %p261 = scmp.lt.s32.totalorder %s260, 15
      %s262 = scalar_select %p261, %s260, 15
      %p263 = scmp.lt.s32.totalorder %s20, 0
      %s264 = scalar_select %p263, %s20, 0
      %s265 = sadd.s32 %s264, %s262
      %s266 = smul.addr %s265, 4
      %s267 = scalar_lea.vmem %s4, %s266
      %s268 = smul.u32 8, %s19
      %v270 = vld [vmem:[%s248] sm:$0xff]
      %v271 = vld [vmem:[%s248 + $0x8] sm:$0xff]
      %v272 = vld [vmem:[%s248 + $0x10] sm:$0xff]
      %v273 = vld [vmem:[%s248 + $0x18] sm:$0xff]
      %v274 = vld [vmem:[%s248 + $0x20] sm:$0xff]
      %v275 = vld [vmem:[%s248 + $0x28] sm:$0xff]
      %v276 = vld [vmem:[%s248 + $0x30] sm:$0xff]
      %v277 = vld [vmem:[%s248 + $0x38] sm:$0xff]
      %v278 = vld [vmem:[%s253] sm:$0xf]
      %v279 = vld [vmem:[%s253 + $0x4] sm:$0xf]
      %v280 = vld [vmem:[%s253 + $0x8] sm:$0xf]
      %v281 = vld [vmem:[%s253 + $0xc] sm:$0xf]
      %v282 = vld [vmem:[%s253 + $0x10] sm:$0xf]
      %v283 = vld [vmem:[%s253 + $0x14] sm:$0xf]
      %v284 = vld [vmem:[%s253 + $0x18] sm:$0xf]
      %v285 = vld [vmem:[%s253 + $0x1c] sm:$0xf]
      %v286 = vld [vmem:[%s253 + $0x20] sm:$0xf]
      %v287 = vld [vmem:[%s253 + $0x24] sm:$0xf]
      %v288 = vld [vmem:[%s253 + $0x28] sm:$0xf]
      %v289 = vld [vmem:[%s253 + $0x2c] sm:$0xf]
      %v290 = vld [vmem:[%s253 + $0x30] sm:$0xf]
      %v291 = vld [vmem:[%s253 + $0x34] sm:$0xf]
      %v292 = vld [vmem:[%s253 + $0x38] sm:$0xf]
      %v293 = vld [vmem:[%s253 + $0x3c] sm:$0xf]
      %v294 = vld [vmem:[%s253 + $0x40] sm:$0xf]
      %v295 = vld [vmem:[%s253 + $0x44] sm:$0xf]
      %v296 = vld [vmem:[%s253 + $0x48] sm:$0xf]
      %v297 = vld [vmem:[%s253 + $0x4c] sm:$0xf]
      %v298 = vld [vmem:[%s253 + $0x50] sm:$0xf]
      %v299 = vld [vmem:[%s253 + $0x54] sm:$0xf]
      %v300 = vld [vmem:[%s253 + $0x58] sm:$0xf]
      %v301 = vld [vmem:[%s253 + $0x5c] sm:$0xf]
      %v302 = vld [vmem:[%s253 + $0x60] sm:$0x3]
      %v311 = vunpack.c.l.b16 %v270
      %v312 = vunpack.c.h.b16 %v270
      %v313 = vunpack.c.l.b16 %v271
      %v314 = vunpack.c.h.b16 %v271
      %v315 = vunpack.c.l.b16 %v272
      %v316 = vunpack.c.h.b16 %v272
      %v317 = vunpack.c.l.b16 %v273
      %v318 = vunpack.c.h.b16 %v273
      %v319 = vunpack.c.l.b16 %v274
      %v320 = vunpack.c.h.b16 %v274
      %v321 = vunpack.c.l.b16 %v275
      %v322 = vunpack.c.h.b16 %v275
      %v323 = vunpack.c.l.b16 %v276
      %v324 = vunpack.c.h.b16 %v276
      %v325 = vunpack.c.l.b16 %v277
      %v326 = vunpack.c.h.b16 %v277
      %v327 = vpack.c.b16 %v313, %v311
      %v328 = vpack.c.b16 %v314, %v312
      %v329 = vpack.c.b16 %v317, %v315
      %v330 = vpack.c.b16 %v318, %v316
      %v331 = vpack.c.b16 %v321, %v319
      %v332 = vpack.c.b16 %v322, %v320
      %v333 = vpack.c.b16 %v325, %v323
      %v334 = vpack.c.b16 %v326, %v324
      %v364 = vunpack.c.l.b16 %v278
      %v365 = vunpack.c.l.b16 %v279
      %v366 = vunpack.c.l.b16 %v280
      %v367 = vunpack.c.l.b16 %v281
      %v368 = vunpack.c.l.b16 %v282
      %v369 = vunpack.c.l.b16 %v283
      %v370 = vunpack.c.l.b16 %v284
      %v371 = vunpack.c.l.b16 %v285
      %v372 = vunpack.c.l.b16 %v286
      %v373 = vunpack.c.l.b16 %v287
      %v374 = vunpack.c.l.b16 %v288
      %v375 = vunpack.c.l.b16 %v289
      %v376 = vunpack.c.l.b16 %v290
      %v377 = vunpack.c.l.b16 %v291
      %v378 = vunpack.c.l.b16 %v292
      %v379 = vunpack.c.l.b16 %v293
      %v380 = vunpack.c.l.b16 %v294
      %v381 = vunpack.c.l.b16 %v295
      %v382 = vunpack.c.l.b16 %v296
      %v383 = vunpack.c.l.b16 %v297
      %v384 = vunpack.c.l.b16 %v298
      %v385 = vunpack.c.l.b16 %v299
      %v386 = vunpack.c.l.b16 %v300
      %v387 = vunpack.c.l.b16 %v301
      %v388 = vunpack.c.l.b16 %v302
      %v389 = vpack.c.b16 %v365, %v364
      %v390 = vpack.c.b16 %v367, %v366
      %v391 = vpack.c.b16 %v369, %v368
      %v392 = vpack.c.b16 %v371, %v370
      %v393 = vpack.c.b16 %v373, %v372
      %v394 = vpack.c.b16 %v375, %v374
      %v395 = vpack.c.b16 %v377, %v376
      %v396 = vpack.c.b16 %v379, %v378
      %v397 = vpack.c.b16 %v381, %v380
      %v398 = vpack.c.b16 %v383, %v382
      %v399 = vpack.c.b16 %v385, %v384
      %v400 = vpack.c.b16 %v387, %v386
      %v401 = vpack.c.b16 %v388, %v388
      %vm414 = vcmask 556032
      %v416 = vsel %vm414, %v328, 0
      %v419 = vsel %vm414, %v330, 0
      %v422 = vsel %vm414, %v332, 0
      %v425 = vsel %vm414, %v334, 0
      %vm427 = vcmask 1041408
      %v429 = vsel %vm427, %v401, 0
      %431 = vmatprep.subr.bf16.mxu0 0
      %432 = vmatpush1.bf16.msra.mxu0 %v396
      %433 = vmatprep.subr.bf16.mxu0 0
      %434 = vmatpush1.bf16.msra.mxu0 %v395
      %435 = vmatprep.subr.bf16.mxu0 0
      %436 = vmatpush1.bf16.msra.mxu0 %v394
      %437 = vmatprep.subr.bf16.mxu0 0
      %438 = vmatpush1.bf16.msra.mxu0 %v393
      %439 = vmatprep.subr.bf16.mxu0 0
      %440 = vmatpush1.bf16.msra.mxu0 %v392
      %441 = vmatprep.subr.bf16.mxu0 0
      %442 = vmatpush1.bf16.msra.mxu0 %v391
      %443 = vmatprep.subr.bf16.mxu0 0
      %444 = vmatpush1.bf16.msra.mxu0 %v390
      %445 = vmatprep.subr.bf16.mxu0 0
      %446 = vmatpush1.bf16.msra.mxu0 %v389
      %447 = vmatprep.subr.bf16.mxu0 0
      %448 = vmatpush2.bf16.msra.mxu0 0
      %449 = vmatprep.subr.bf16.mxu0 0
      %450 = vmatpush2.bf16.msra.mxu0 0
      %451 = vmatprep.subr.bf16.mxu0 0
      %452 = vmatpush2.bf16.msra.mxu0 0
      %453 = vmatprep.subr.bf16.mxu0 0
      %454 = vmatpush2.bf16.msra.mxu0 %v429
      %455 = vmatprep.subr.bf16.mxu0 0
      %456 = vmatpush2.bf16.msra.mxu0 %v400
      %457 = vmatprep.subr.bf16.mxu0 0
      %458 = vmatpush2.bf16.msra.mxu0 %v399
      %459 = vmatprep.subr.bf16.mxu0 0
      %460 = vmatpush2.bf16.msra.mxu0 %v398
      %461 = vmatprep.subr.bf16.mxu0 0
      %462 = vmatpush2.bf16.msra.mxu0 %v397
      %463 = vmatprep.mubr.bf16.mxu0 %v416
      %464 = vmatmul.mubr.bf16.gmra.mxu0 %v327
      %v465 = vpop.f32.mrf.mxu0
      %v466 = vadd.f32 0.0, %v465
      %v467 = vpop.f32.mrf.mxu0
      %v468 = vpop.f32.mrf.mxu0
      %v469 = vadd.f32 0.0, %v468
      %v470 = vpop.f32.mrf.mxu0
      %471 = vmatprep.mubr.bf16.mxu0 %v419
      %472 = vmatmul.mubr.bf16.gmra.mxu0 %v329
      %v473 = vpop.f32.mrf.mxu0
      %v474 = vadd.f32 0.0, %v473
      %v475 = vpop.f32.mrf.mxu0
      %v476 = vpop.f32.mrf.mxu0
      %v477 = vadd.f32 0.0, %v476
      %v478 = vpop.f32.mrf.mxu0
      %479 = vmatprep.mubr.bf16.mxu0 %v422
      %480 = vmatmul.mubr.bf16.gmra.mxu0 %v331
      %v481 = vpop.f32.mrf.mxu0
      %v482 = vadd.f32 0.0, %v481
      %v483 = vpop.f32.mrf.mxu0
      %v484 = vpop.f32.mrf.mxu0
      %v485 = vadd.f32 0.0, %v484
      %v486 = vpop.f32.mrf.mxu0
      %487 = vmatprep.mubr.bf16.mxu0 %v425
      %488 = vmatmul.mubr.bf16.gmra.mxu0 %v333
      %v489 = vpop.f32.mrf.mxu0
      %v490 = vadd.f32 0.0, %v489
      %v491 = vpop.f32.mrf.mxu0
      %v492 = vpop.f32.mrf.mxu0
      %v493 = vadd.f32 0.0, %v492
      %v494 = vpop.f32.mrf.mxu0
      %495 = vdwg.mxu0
      %v496 = vld [vmem:[%s256] sm:$0x1]
      %v498 = vlaneseq
      %v499 = vshrl.u32 %v498, 7
      %v500 = vsub.s32 0, %v499
      %v501 = vrot.slane %v496, %v500
      %v503 = vmul.f32 %v466, %v501
      %v504 = vmul.f32 %v469, %v501
      %v505 = vmul.f32 %v474, %v501
      %v506 = vmul.f32 %v477, %v501
      %v507 = vmul.f32 %v482, %v501
      %v508 = vmul.f32 %v485, %v501
      %v509 = vmul.f32 %v490, %v501
      %v510 = vmul.f32 %v493, %v501
      %v511 = vld [vmem:[%s259] sm:$0x1]
      %v513 = vlaneseq
      %v514 = vshrl.u32 %v513, 7
      %v515 = vsub.s32 0, %v514
      %v516 = vrot.slane %v511, %v515
      %v518 = vadd.f32 %v503, %v516
      %v519 = vadd.f32 %v504, %v516
      %v520 = vadd.f32 %v505, %v516
      %v521 = vadd.f32 %v506, %v516
      %v522 = vadd.f32 %v507, %v516
      %v523 = vadd.f32 %v508, %v516
      %v524 = vadd.f32 %v509, %v516
      %v525 = vadd.f32 %v510, %v516
      %v526 = vmax.f32 %v518, 0.0
      %v527 = vmax.f32 %v519, 0.0
      %v528 = vmax.f32 %v520, 0.0
      %v529 = vmax.f32 %v521, 0.0
      %v530 = vmax.f32 %v522, 0.0
      %v531 = vmax.f32 %v523, 0.0
      %v532 = vmax.f32 %v524, 0.0
      %v533 = vmax.f32 %v525, 0.0
      %v534 = vpack.c.bf16 %v527, %v526
      %v535 = vpack.c.bf16 %v529, %v528
      %v536 = vpack.c.bf16 %v531, %v530
      %v537 = vpack.c.bf16 %v533, %v532
      %v542 = vunpack.c.l.b16 %v534
      %v543 = vunpack.c.h.b16 %v534
      %v544 = vunpack.c.l.b16 %v535
      %v545 = vunpack.c.h.b16 %v535
      %v546 = vunpack.c.l.b16 %v536
      %v547 = vunpack.c.h.b16 %v536
      %v548 = vunpack.c.l.b16 %v537
      %v549 = vunpack.c.h.b16 %v537
      %v550 = vpack.c.b16 %v542, %v542
      %v551 = vpack.c.b16 %v543, %v543
      %v552 = vpack.c.b16 %v544, %v544
      %v553 = vpack.c.b16 %v545, %v545
      %v554 = vpack.c.b16 %v546, %v546
      %v555 = vpack.c.b16 %v547, %v547
      %v556 = vpack.c.b16 %v548, %v548
      %v557 = vpack.c.b16 %v549, %v549
      %vm566 = vcmask 519168
      %567 = vst.msk [vmem:[%s267] sm:$0xf] %vm566, %v550
      %568 = vst.msk [vmem:[%s267 + $0x4] sm:$0xf] %vm566, %v551
      %569 = vst.msk [vmem:[%s267 + $0x8] sm:$0xf] %vm566, %v552
      %570 = vst.msk [vmem:[%s267 + $0xc] sm:$0xf] %vm566, %v553
      %571 = vst.msk [vmem:[%s267 + $0x10] sm:$0xf] %vm566, %v554
      %572 = vst.msk [vmem:[%s267 + $0x14] sm:$0xf] %vm566, %v555
      %573 = vst.msk [vmem:[%s267 + $0x18] sm:$0xf] %vm566, %v556
      %574 = vst.msk [vmem:[%s267 + $0x1c] sm:$0xf] %vm566, %v557
      %s575 = smul.u32 8, %s19
      %p576 = scmp.lt.s32.totalorder %s575, 15
      %s577 = scalar_select %p576, %s575, 15
      %p578 = scmp.lt.s32.totalorder %s20, 0
      %s579 = scalar_select %p578, %s20, 0
      %s580 = sadd.s32 %s579, %s577
      %s581 = smul.addr %s580, 4
      %s582 = scalar_lea.vmem %s4, %s581
      // Predicated region
      $region37: #{tpu_custom_call.1} parent=35 // pred_check
        %p583 = pneg %p151
      $region38: #{tpu_custom_call.1} parent=35 // pred_check_branch
        %585 = sbr.rel (%p583) target = $region40
      $region39: #{tpu_custom_call.1} parent=35 // pred_region
        %s586 = smul.u32 8, %s19
      $region40: #{tpu_custom_call.1} parent=35 // pred_fallthru
        _
    $region36: #{tpu_custom_call.1} parent=5 // pred_fallthru
      _
    %p587 = scmp.le.s32.totalorder 2, %s10
    // Predicated region
    $region41: #{tpu_custom_call.1} parent=5 // pred_check
      %p588 = pneg %p587
    $region42: #{tpu_custom_call.1} parent=5 // pred_check_branch
      %590 = sbr.rel (%p588) target = $region44
    $region43: #{tpu_custom_call.1} parent=5 // pred_region
      %s591 = ssub.s32 %s10, 2
      // Predicated region
      $region45: #{tpu_custom_call.1} parent=43 // pred_check
        %p592 = pneg %p157
      $region46: #{tpu_custom_call.1} parent=43 // pred_check_branch
        %594 = sbr.rel (%p592) target = $region48
      $region47: #{tpu_custom_call.1} parent=43 // pred_region
        %s595 = smul.u32 8, %s21
        %p596 = scmp.lt.s32.totalorder %s595, 15
        %s597 = scalar_select %p596, %s595, 15
        %p598 = scmp.lt.s32.totalorder %s22, 0
        %s599 = scalar_select %p598, %s22, 0
        %s600 = sadd.s32 %s599, %s597
        %s601 = smul.addr %s600, 4
        %s602 = scalar_lea.vmem %s4, %s601
      $region48: #{tpu_custom_call.1} parent=43 // pred_fallthru
        _
    $region44: #{tpu_custom_call.1} parent=5 // pred_fallthru
      _
  $region6: #{tpu_custom_call.1} parent=0 // loop_footer
    %s14 = sadd.s32 1, %s10
  $region7: #{tpu_custom_call.1} parent=0 // loop_footer_branch
    %9 = sbr.rel target = $region3
  $region8: #{tpu_custom_call.1} parent=0 // loop_exit
    _

</llo_original>
